<compile_context>
chip_gen: v6e
topology: v6e:2x2x1
jax: 0.10.0
libtpu: 0.0.40
codegen_flags: <defaults>
</compile_context>

<pallas_src>
import functools

import jax
import jax.numpy as jnp
from jax.experimental import pallas as pl
from jax.experimental.pallas import tpu as pltpu


def _round_up(x, m):
    return ((x + m - 1) // m) * m


def _mlp_kernel(*refs, num_layers, compute_dtype):
    # refs = (x_ref, w0, b0, w1, b1, ..., w{L-1}, b{L-1}, out_ref)
    x_ref = refs[0]
    out_ref = refs[-1]
    param_refs = refs[1:-1]

    h = x_ref[...]
    for i in range(num_layers):
        w = param_refs[2 * i][...]
        b = param_refs[2 * i + 1][...].astype(jnp.float32)
        # Matmul inputs in compute_dtype (f32 default / bf16 opt-in), f32 accumulate.
        h = jnp.dot(h.astype(compute_dtype), w.astype(compute_dtype),
                    preferred_element_type=jnp.float32) + b
        if i < num_layers - 1:          # activation after every layer except last
            h = jnp.tanh(h)             # elementwise stays f32 (v5e-safe)
    out_ref[...] = h.astype(out_ref.dtype)


def _choose_batch_tile(B, sublane_align, cap=2048):
    """One grid step whenever the batch fits a large tile; otherwise big tiles.

    Small/medium batches: a single step avoids paying the ~0.35 us per-step
    overhead more than once (v5e/v6e are single-TC, so splitting buys nothing).
    Large batches: 2048-row tiles amortize the per-step overhead and give v7x's
    two TensorCores multiple "parallel" steps to shard.
    """
    if B <= cap:
        return _round_up(max(B, 1), sublane_align)
    return cap  # 2048 is a multiple of 8 / 16 / 32


def mlp_forward(x, weights, biases, *, batch_tile=None, compute_dtype=jnp.float32):
    """x: (B, input_dim). weights[i]: (fan_in, fan_out). biases[i]: (1, fan_out)."""
    assert len(weights) == len(biases)
    num_layers = len(weights)
    B, in_dim = x.shape
    out_dim = weights[-1].shape[1]
    out_dtype = x.dtype

    # Sublane alignment follows the (packed) compute dtype.
    itemsize = jnp.dtype(compute_dtype).itemsize
    sublane_align = {4: 8, 2: 16, 1: 32}.get(itemsize, 8)

    # ---- choose batch tile and pad ragged batch (no divisibility assert) ----
    if batch_tile is None:
        batch_tile = _choose_batch_tile(B, sublane_align)
    batch_tile = max(sublane_align, _round_up(batch_tile, sublane_align))
    B_pad = _round_up(B, batch_tile)
    if B_pad != B:
        x = jnp.pad(x, ((0, B_pad - B), (0, 0)))
    grid = (B_pad // batch_tile,)

    # ---- inputs passed as-is; all casting happens inside the kernel ----
    args = [x]
    in_specs = [pl.BlockSpec((batch_tile, in_dim), lambda i: (i, 0))]
    for w, b in zip(weights, biases):
        in_specs.append(pl.BlockSpec(w.shape, lambda i: (0, 0)))
        in_specs.append(pl.BlockSpec(b.shape, lambda i: (0, 0)))
        args.append(w)
        args.append(b)

    kernel = functools.partial(_mlp_kernel, num_layers=num_layers,
                               compute_dtype=compute_dtype)

    out = pl.pallas_call(
        kernel,
        # Unpadded, original-dtype output: out_dim equals the full array dim,
        # so a (batch_tile, out_dim) block is legal and HBM writeback stays at
        # out_dim * itemsize bytes/row.
        out_shape=jax.ShapeDtypeStruct((B_pad, out_dim), out_dtype),
        grid_spec=pltpu.PrefetchScalarGridSpec(
            num_scalar_prefetch=0,
            grid=grid,
            in_specs=in_specs,
            out_specs=pl.BlockSpec((batch_tile, out_dim), lambda i: (i, 0)),
        ),
        compiler_params=pltpu.CompilerParams(
            dimension_semantics=("parallel",)),
    )(*args)

    if B_pad != B:
        out = out[:B]
    return out


def init_mlp_params(key, input_dim, output_dim, depth, mid_layer_size):
    """Deterministic init mimicking nn.Linear default (U(-1/sqrt(fan_in), +))."""
    dims = [input_dim] + [mid_layer_size] * (depth + 1) + [output_dim]
    weights, biases = [], []
    for fan_in, fan_out in zip(dims[:-1], dims[1:]):
        key, kw, kb = jax.random.split(key, 3)
        bound = 1.0 / (fan_in ** 0.5)
        # PyTorch stores (fan_out, fan_in); we keep the transposed (fan_in, fan_out).
        w = jax.random.uniform(kw, (fan_in, fan_out), jnp.float32, -bound, bound)
        b = jax.random.uniform(kb, (1, fan_out), jnp.float32, -bound, bound)
        weights.append(w)
        biases.append(b)
    return weights, biases


def mlp_reference(x, weights, biases):
    h = x
    for i, (w, b) in enumerate(zip(weights, biases)):
        h = h @ w + b
        if i < len(weights) - 1:
            h = jnp.tanh(h)
    return h


if __name__ == "__main__":
    # Shapes consistent with the module: MLP(input_dim=4, output_dim=3,
    # depth=2, mid_layer_size=32, activation='tanh'), batch=16.
    input_dim, output_dim, depth, mid = 4, 3, 2, 32
    batch = 16

    key = jax.random.PRNGKey(0)
    key, kx = jax.random.split(key)
    x = jax.random.normal(kx, (batch, input_dim), jnp.float32)
    weights, biases = init_mlp_params(key, input_dim, output_dim, depth, mid)

    ref = mlp_reference(x, weights, biases)

    # f32 path (tight check).
    out = jax.block_until_ready(mlp_forward(x, weights, biases))
    if out.shape != ref.shape or not jnp.allclose(out, ref, atol=1e-5, rtol=1e-5):
        raise AssertionError("Pallas MLP (f32) output does not match reference")

    # Ragged batch (exercises the pad-and-slice path).
    x_ragged = x[:13]
    out_r = jax.block_until_ready(mlp_forward(x_ragged, weights, biases))
    if not jnp.allclose(out_r, ref[:13], atol=1e-5, rtol=1e-5):
        raise AssertionError("Pallas MLP (ragged batch) output does not match reference")

    # bf16 matmul-input path (f32 accumulate / activations), loose check.
    out_bf16 = jax.block_until_ready(
        mlp_forward(x, weights, biases, compute_dtype=jnp.bfloat16))
    if not jnp.allclose(out_bf16, ref, atol=5e-2, rtol=5e-2):
        raise AssertionError("Pallas MLP (bf16 inputs) output does not match reference")

    print("KERNEL_OK")
</pallas_src>

<mosaic_0001>
module attributes {stable_mosaic.version = 11 : i64} {
  func.func @_mlp_kernel(%arg0: i32, %arg1: memref<16x4xf32, #tpu.memory_space<vmem>>, %arg2: memref<4x32xf32, #tpu.memory_space<vmem>>, %arg3: memref<1x32xf32, #tpu.memory_space<vmem>>, %arg4: memref<32x32xf32, #tpu.memory_space<vmem>>, %arg5: memref<1x32xf32, #tpu.memory_space<vmem>>, %arg6: memref<32x32xf32, #tpu.memory_space<vmem>>, %arg7: memref<1x32xf32, #tpu.memory_space<vmem>>, %arg8: memref<32x3xf32, #tpu.memory_space<vmem>>, %arg9: memref<1x3xf32, #tpu.memory_space<vmem>>, %arg10: memref<16x3xf32, #tpu.memory_space<vmem>>) attributes {dimension_semantics = [#tpu.dimension_semantics<parallel>], iteration_bounds = array<i64: 1>, scalar_prefetch = 0 : i64, scratch_operands = 0 : i64, tpu.core_type = #tpu.core_type<tc>, window_params = [{transform_indices = @transform_0, window_bounds = array<i64: 16, 4>}, {pipeline_mode = #tpu.pipeline_mode<synchronous>, transform_indices = @transform_1, window_bounds = array<i64: 4, 32>}, {pipeline_mode = #tpu.pipeline_mode<synchronous>, transform_indices = @transform_2, window_bounds = array<i64: 1, 32>}, {pipeline_mode = #tpu.pipeline_mode<synchronous>, transform_indices = @transform_3, window_bounds = array<i64: 32, 32>}, {pipeline_mode = #tpu.pipeline_mode<synchronous>, transform_indices = @transform_4, window_bounds = array<i64: 1, 32>}, {pipeline_mode = #tpu.pipeline_mode<synchronous>, transform_indices = @transform_5, window_bounds = array<i64: 32, 32>}, {pipeline_mode = #tpu.pipeline_mode<synchronous>, transform_indices = @transform_6, window_bounds = array<i64: 1, 32>}, {pipeline_mode = #tpu.pipeline_mode<synchronous>, transform_indices = @transform_7, window_bounds = array<i64: 32, 3>}, {pipeline_mode = #tpu.pipeline_mode<synchronous>, transform_indices = @transform_8, window_bounds = array<i64: 1, 3>}, {transform_indices = @transform_9, window_bounds = array<i64: 16, 3>}]} {
    %c0 = arith.constant 0 : index
    %c0_0 = arith.constant 0 : index
    %0 = vector.load %arg1[%c0, %c0_0] : memref<16x4xf32, #tpu.memory_space<vmem>>, vector<16x4xf32>
    %c0_1 = arith.constant 0 : index
    %c0_2 = arith.constant 0 : index
    %1 = vector.load %arg2[%c0_1, %c0_2] : memref<4x32xf32, #tpu.memory_space<vmem>>, vector<4x32xf32>
    %c0_3 = arith.constant 0 : index
    %c0_4 = arith.constant 0 : index
    %2 = vector.load %arg3[%c0_3, %c0_4] : memref<1x32xf32, #tpu.memory_space<vmem>>, vector<1x32xf32>
    %cst = arith.constant dense<0.000000e+00> : vector<16x32xf32>
    %3 = tpu.matmul %0, %1, %cst {dimension_numbers = #tpu.dot_dimension_numbers<[1], [0], [0], [1], [0, 0, 1, 1], [], []>} : vector<16x4xf32>, vector<4x32xf32>, vector<16x32xf32> -> vector<16x32xf32>
    %4 = vector.broadcast %2 : vector<1x32xf32> to vector<16x32xf32>
    %5 = arith.addf %3, %4 : vector<16x32xf32>
    %6 = math.tanh %5 : vector<16x32xf32>
    %c0_5 = arith.constant 0 : index
    %c0_6 = arith.constant 0 : index
    %7 = vector.load %arg4[%c0_5, %c0_6] : memref<32x32xf32, #tpu.memory_space<vmem>>, vector<32x32xf32>
    %c0_7 = arith.constant 0 : index
    %c0_8 = arith.constant 0 : index
    %8 = vector.load %arg5[%c0_7, %c0_8] : memref<1x32xf32, #tpu.memory_space<vmem>>, vector<1x32xf32>
    %cst_9 = arith.constant dense<0.000000e+00> : vector<16x32xf32>
    %9 = tpu.matmul %6, %7, %cst_9 {dimension_numbers = #tpu.dot_dimension_numbers<[1], [0], [0], [1], [0, 0, 1, 1], [], []>} : vector<16x32xf32>, vector<32x32xf32>, vector<16x32xf32> -> vector<16x32xf32>
    %10 = vector.broadcast %8 : vector<1x32xf32> to vector<16x32xf32>
    %11 = arith.addf %9, %10 : vector<16x32xf32>
    %12 = math.tanh %11 : vector<16x32xf32>
    %c0_10 = arith.constant 0 : index
    %c0_11 = arith.constant 0 : index
    %13 = vector.load %arg6[%c0_10, %c0_11] : memref<32x32xf32, #tpu.memory_space<vmem>>, vector<32x32xf32>
    %c0_12 = arith.constant 0 : index
    %c0_13 = arith.constant 0 : index
    %14 = vector.load %arg7[%c0_12, %c0_13] : memref<1x32xf32, #tpu.memory_space<vmem>>, vector<1x32xf32>
    %cst_14 = arith.constant dense<0.000000e+00> : vector<16x32xf32>
    %15 = tpu.matmul %12, %13, %cst_14 {dimension_numbers = #tpu.dot_dimension_numbers<[1], [0], [0], [1], [0, 0, 1, 1], [], []>} : vector<16x32xf32>, vector<32x32xf32>, vector<16x32xf32> -> vector<16x32xf32>
    %16 = vector.broadcast %14 : vector<1x32xf32> to vector<16x32xf32>
    %17 = arith.addf %15, %16 : vector<16x32xf32>
    %18 = math.tanh %17 : vector<16x32xf32>
    %c0_15 = arith.constant 0 : index
    %c0_16 = arith.constant 0 : index
    %19 = vector.load %arg8[%c0_15, %c0_16] : memref<32x3xf32, #tpu.memory_space<vmem>>, vector<32x3xf32>
    %c0_17 = arith.constant 0 : index
    %c0_18 = arith.constant 0 : index
    %20 = vector.load %arg9[%c0_17, %c0_18] : memref<1x3xf32, #tpu.memory_space<vmem>>, vector<1x3xf32>
    %cst_19 = arith.constant dense<0.000000e+00> : vector<16x3xf32>
    %21 = tpu.matmul %18, %19, %cst_19 {dimension_numbers = #tpu.dot_dimension_numbers<[1], [0], [0], [1], [0, 0, 1, 1], [], []>} : vector<16x32xf32>, vector<32x3xf32>, vector<16x3xf32> -> vector<16x3xf32>
    %22 = vector.broadcast %20 : vector<1x3xf32> to vector<16x3xf32>
    %23 = arith.addf %21, %22 : vector<16x3xf32>
    %c0_20 = arith.constant 0 : index
    %c0_21 = arith.constant 0 : index
    %24 = vector.load %arg10[%c0_20, %c0_21] : memref<16x3xf32, #tpu.memory_space<vmem>>, vector<16x3xf32>
    tpu.vector_store %arg10[%c0_20, %c0_21], %23 {strides = array<i32>} : memref<16x3xf32, #tpu.memory_space<vmem>>, vector<16x3xf32>,
    return
  }
  func.func @transform_0(%arg0: i32) -> (i32, i32) {
    %c0_i32 = arith.constant 0 : i32
    %c0_i32_0 = arith.constant 0 : i32
    return %arg0, %c0_i32 : i32, i32
  }
  func.func @transform_1(%arg0: i32) -> (i32, i32) {
    %c0_i32 = arith.constant 0 : i32
    %c0_i32_0 = arith.constant 0 : i32
    %c0_i32_1 = arith.constant 0 : i32
    return %c0_i32, %c0_i32_0 : i32, i32
  }
  func.func @transform_2(%arg0: i32) -> (i32, i32) {
    %c0_i32 = arith.constant 0 : i32
    %c0_i32_0 = arith.constant 0 : i32
    %c0_i32_1 = arith.constant 0 : i32
    return %c0_i32, %c0_i32_0 : i32, i32
  }
  func.func @transform_3(%arg0: i32) -> (i32, i32) {
    %c0_i32 = arith.constant 0 : i32
    %c0_i32_0 = arith.constant 0 : i32
    %c0_i32_1 = arith.constant 0 : i32
    return %c0_i32, %c0_i32_0 : i32, i32
  }
  func.func @transform_4(%arg0: i32) -> (i32, i32) {
    %c0_i32 = arith.constant 0 : i32
    %c0_i32_0 = arith.constant 0 : i32
    %c0_i32_1 = arith.constant 0 : i32
    return %c0_i32, %c0_i32_0 : i32, i32
  }
  func.func @transform_5(%arg0: i32) -> (i32, i32) {
    %c0_i32 = arith.constant 0 : i32
    %c0_i32_0 = arith.constant 0 : i32
    %c0_i32_1 = arith.constant 0 : i32
    return %c0_i32, %c0_i32_0 : i32, i32
  }
  func.func @transform_6(%arg0: i32) -> (i32, i32) {
    %c0_i32 = arith.constant 0 : i32
    %c0_i32_0 = arith.constant 0 : i32
    %c0_i32_1 = arith.constant 0 : i32
    return %c0_i32, %c0_i32_0 : i32, i32
  }
  func.func @transform_7(%arg0: i32) -> (i32, i32) {
    %c0_i32 = arith.constant 0 : i32
    %c0_i32_0 = arith.constant 0 : i32
    %c0_i32_1 = arith.constant 0 : i32
    return %c0_i32, %c0_i32_0 : i32, i32
  }
  func.func @transform_8(%arg0: i32) -> (i32, i32) {
    %c0_i32 = arith.constant 0 : i32
    %c0_i32_0 = arith.constant 0 : i32
    %c0_i32_1 = arith.constant 0 : i32
    return %c0_i32, %c0_i32_0 : i32, i32
  }
  func.func @transform_9(%arg0: i32) -> (i32, i32) {
    %c0_i32 = arith.constant 0 : i32
    %c0_i32_0 = arith.constant 0 : i32
    return %arg0, %c0_i32 : i32, i32
  }
}

</mosaic_0001>

<llo_original>
// kernel: tpu_custom_call.1
$region0: #{tpu_custom_call.1}
  #allocation0 [shape = 'u32[]', space=smem, size = 0x4, offset = 0x4, fixed_abs, tag = 'smem constant byte address 0x4 - core index']
  #allocation1 [shape = 'u32[144,128]{1,0:T(1,128)}', space=vmem, size = 0x12000, scoped, tag = 'internal scratch']
  %s0 = inlined_call_operand.vmem [shape: f32[16,4], index: 0, kind: input, shape index: {}]
  %s1 = inlined_call_operand.hbm [shape: f32[4,32], index: 1, kind: input, shape index: {}]
  %s2 = inlined_call_operand.hbm [shape: f32[1,32], index: 2, kind: input, shape index: {}]
  %s3 = inlined_call_operand.vmem [shape: f32[32,32], index: 3, kind: input, shape index: {}]
  %s4 = inlined_call_operand.hbm [shape: f32[1,32], index: 4, kind: input, shape index: {}]
  %s5 = inlined_call_operand.vmem [shape: f32[32,32], index: 5, kind: input, shape index: {}]
  %s6 = inlined_call_operand.hbm [shape: f32[1,32], index: 6, kind: input, shape index: {}]
  %s7 = inlined_call_operand.vmem [shape: f32[32,3], index: 7, kind: input, shape index: {}]
  %s8 = inlined_call_operand.vmem [shape: f32[1,3], index: 8, kind: input, shape index: {}]
  %s9 = inlined_call_operand.vmem [shape: f32[16,3], index: 9, kind: output, shape index: {}]
  %s10 = sld [smem:[#allocation0]]
  $region62: #{tpu_custom_call.1} parent=0
    _
  %s12 = ssub.s32 1, %s10
  %s13 = scalar_select 0, %s12, %s10
  $region1: #{tpu_custom_call.1} parent=0
    #allocation2 [shape = 'u8[2048]{0}', space=vmem, size = 0x800, scoped, tag = 'input window, operand 1, single buffered']
    #allocation3 [shape = 's32[1]{0}', space=sflag, size = 0x4, scoped, tag = 'scoped memory for tpu_custom_call.1']
    #allocation4 [shape = 'u8[512]{0}', space=vmem, size = 0x400, scoped, tag = 'input window, operand 2, single buffered']
    #allocation5 [shape = 's32[1]{0}', space=sflag, size = 0x4, scoped, tag = 'scoped memory for tpu_custom_call.1']
    #allocation6 [shape = 'u8[512]{0}', space=vmem, size = 0x400, scoped, tag = 'input window, operand 4, single buffered']
    #allocation7 [shape = 'u8[512]{0}', space=vmem, size = 0x400, scoped, tag = 'input window, operand 6, single buffered']
    #allocation8 [shape = 's32[1]{0}', space=sflag, size = 0x4, scoped, tag = 'scoped memory for tpu_custom_call.1']
    %14 = vsyncpa [#allocation3], 0
    %15 = vsyncpa [#allocation5], 0
    %16 = vsyncpa [#allocation8], 0
    // Predicated region
    $region2: #{tpu_custom_call.1} parent=1 // pred_check
      _
    $region3: #{tpu_custom_call.1} parent=1 // pred_check_branch
      %18 = sbr.rel (0) target = $region5
    $region4: #{tpu_custom_call.1} parent=1 // pred_region
      _
    $region5: #{tpu_custom_call.1} parent=1 // pred_fallthru
      _
    // Predicated region
    $region6: #{tpu_custom_call.1} parent=1 // pred_check
      _
    $region7: #{tpu_custom_call.1} parent=1 // pred_check_branch
      %20 = sbr.rel (0) target = $region9
    $region8: #{tpu_custom_call.1} parent=1 // pred_region
      %s22 = ssub.s32 64, 64
      %23 = vsyncadd [#allocation3], %s22
      %s25 = sshll.u32 [#allocation2], 4
      %s26 = int_to_ptr.vmem [resolvable:$true] %s25
      %28 = dma.hbm_to_vmem [thread:$0]  %s1, 64, %s26, [#allocation3]
    $region9: #{tpu_custom_call.1} parent=1 // pred_fallthru
      _
    // Predicated region
    $region10: #{tpu_custom_call.1} parent=1 // pred_check
      _
    $region11: #{tpu_custom_call.1} parent=1 // pred_check_branch
      %30 = sbr.rel (0) target = $region13
    $region12: #{tpu_custom_call.1} parent=1 // pred_region
      %s32 = ssub.s32 16, 16
      %33 = vsyncadd [#allocation5], %s32
      %s35 = sshll.u32 [#allocation4], 4
      %s36 = int_to_ptr.vmem [resolvable:$true] %s35
      %38 = dma.hbm_to_vmem [thread:$0]  %s2, 16, %s36, [#allocation5]
    $region13: #{tpu_custom_call.1} parent=1 // pred_fallthru
      _
    // Predicated region
    $region14: #{tpu_custom_call.1} parent=1 // pred_check
      _
    $region15: #{tpu_custom_call.1} parent=1 // pred_check_branch
      %40 = sbr.rel (0) target = $region17
    $region16: #{tpu_custom_call.1} parent=1 // pred_region
      _
    $region17: #{tpu_custom_call.1} parent=1 // pred_fallthru
      _
    // Predicated region
    $region18: #{tpu_custom_call.1} parent=1 // pred_check
      _
    $region19: #{tpu_custom_call.1} parent=1 // pred_check_branch
      %42 = sbr.rel (0) target = $region21
    $region20: #{tpu_custom_call.1} parent=1 // pred_region
      %s44 = ssub.s32 16, 16
      %45 = vsyncadd [#allocation5], %s44
      %s47 = sshll.u32 [#allocation6], 4
      %s48 = int_to_ptr.vmem [resolvable:$true] %s47
      %50 = dma.hbm_to_vmem [thread:$0]  %s4, 16, %s48, [#allocation5]
    $region21: #{tpu_custom_call.1} parent=1 // pred_fallthru
      _
    // Predicated region
    $region22: #{tpu_custom_call.1} parent=1 // pred_check
      _
    $region23: #{tpu_custom_call.1} parent=1 // pred_check_branch
      %52 = sbr.rel (0) target = $region25
    $region24: #{tpu_custom_call.1} parent=1 // pred_region
      _
    $region25: #{tpu_custom_call.1} parent=1 // pred_fallthru
      _
    // Predicated region
    $region26: #{tpu_custom_call.1} parent=1 // pred_check
      _
    $region27: #{tpu_custom_call.1} parent=1 // pred_check_branch
      %54 = sbr.rel (0) target = $region29
    $region28: #{tpu_custom_call.1} parent=1 // pred_region
      %s56 = ssub.s32 16, 16
      %57 = vsyncadd [#allocation8], %s56
      %s59 = sshll.u32 [#allocation7], 4
      %s60 = int_to_ptr.vmem [resolvable:$true] %s59
      %62 = dma.hbm_to_vmem [thread:$0]  %s6, 16, %s60, [#allocation8]
    $region29: #{tpu_custom_call.1} parent=1 // pred_fallthru
      _
    // Predicated region
    $region30: #{tpu_custom_call.1} parent=1 // pred_check
      _
    $region31: #{tpu_custom_call.1} parent=1 // pred_check_branch
      %64 = sbr.rel (0) target = $region33
    $region32: #{tpu_custom_call.1} parent=1 // pred_region
      _
    $region33: #{tpu_custom_call.1} parent=1 // pred_fallthru
      _
    // Predicated region
    $region34: #{tpu_custom_call.1} parent=1 // pred_check
      _
    $region35: #{tpu_custom_call.1} parent=1 // pred_check_branch
      %66 = sbr.rel (0) target = $region37
    $region36: #{tpu_custom_call.1} parent=1 // pred_region
      _
    $region37: #{tpu_custom_call.1} parent=1 // pred_fallthru
      _
    // Predicated region
    $region38: #{tpu_custom_call.1} parent=1 // pred_check
      _
    $region39: #{tpu_custom_call.1} parent=1 // pred_check_branch
      %68 = sbr.rel (0) target = $region41
    $region40: #{tpu_custom_call.1} parent=1 // pred_region
      %69 = dma.done [#allocation3], 64
    $region41: #{tpu_custom_call.1} parent=1 // pred_fallthru
      _
    // Predicated region
    $region42: #{tpu_custom_call.1} parent=1 // pred_check
      _
    $region43: #{tpu_custom_call.1} parent=1 // pred_check_branch
      %71 = sbr.rel (0) target = $region45
    $region44: #{tpu_custom_call.1} parent=1 // pred_region
      %72 = dma.done [#allocation5], 16
    $region45: #{tpu_custom_call.1} parent=1 // pred_fallthru
      _
    // Predicated region
    $region46: #{tpu_custom_call.1} parent=1 // pred_check
      _
    $region47: #{tpu_custom_call.1} parent=1 // pred_check_branch
      %74 = sbr.rel (0) target = $region49
    $region48: #{tpu_custom_call.1} parent=1 // pred_region
      %75 = dma.done [#allocation5], 16
    $region49: #{tpu_custom_call.1} parent=1 // pred_fallthru
      _
    // Predicated region
    $region50: #{tpu_custom_call.1} parent=1 // pred_check
      _
    $region51: #{tpu_custom_call.1} parent=1 // pred_check_branch
      %77 = sbr.rel (0) target = $region53
    $region52: #{tpu_custom_call.1} parent=1 // pred_region
      %78 = dma.done [#allocation8], 16
    $region53: #{tpu_custom_call.1} parent=1 // pred_fallthru
      _
    %v79 = vld [vmem:[%s0] sm:$0xff]
    %v80 = vld [vmem:[%s0 + $0x8] sm:$0xff]
    %v81 = vld [vmem:[#allocation2] sm:$0xf]
    %v82 = vld [vmem:[#allocation4] sm:$0x1]
    %v84 = vlaneseq
    %v85 = vshrl.u32 %v84, 7
    %v86 = vsub.s32 0, %v85
    %v87 = vrot.slane %v82, %v86
    %vm89 = vcmask 31744
    %v91 = vsel %vm89, %v79, 0
    %v94 = vsel %vm89, %v80, 0
    %vm96 = vcmask 1043456
    %v98 = vsel %vm96, %v81, 0
    %100 = vmatprep.subr.mxu0 0.0
    %101 = vmatpush1.msra.mxu0 0.0
    %102 = vmatprep.subr.mxu0 0.0
    %103 = vmatpush1.msra.mxu0 0.0
    %104 = vmatprep.subr.mxu0 0.0
    %105 = vmatpush1.msra.mxu0 0.0
    %106 = vmatprep.subr.mxu0 0.0
    %107 = vmatpush1.msra.mxu0 0.0
    %108 = vmatprep.subr.mxu0 0.0
    %109 = vmatpush1.msra.mxu0 0.0
    %110 = vmatprep.subr.mxu0 0.0
    %111 = vmatpush1.msra.mxu0 0.0
    %112 = vmatprep.subr.mxu0 0.0
    %113 = vmatpush1.msra.mxu0 0.0
    %114 = vmatprep.subr.mxu0 0.0
    %115 = vmatpush1.msra.mxu0 0.0
    %116 = vmatprep.subr.mxu0 0.0
    %117 = vmatpush1.msra.mxu0 0.0
    %118 = vmatprep.subr.mxu0 0.0
    %119 = vmatpush1.msra.mxu0 0.0
    %120 = vmatprep.subr.mxu0 0.0
    %121 = vmatpush1.msra.mxu0 0.0
    %122 = vmatprep.subr.mxu0 0.0
    %123 = vmatpush1.msra.mxu0 0.0
    %124 = vmatprep.subr.mxu0 0.0
    %125 = vmatpush1.msra.mxu0 0.0
    %126 = vmatprep.subr.mxu0 0.0
    %127 = vmatpush1.msra.mxu0 0.0
    %128 = vmatprep.subr.mxu0 0.0
    %129 = vmatpush1.msra.mxu0 0.0
    %130 = vmatprep.subr.mxu0 0.0
    %131 = vmatpush1.msra.mxu0 %v98
    %132 = vmatprep.subr.mxu0 0.0
    %133 = vmatpush2.msra.mxu0 0.0
    %134 = vmatprep.subr.mxu0 0.0
    %135 = vmatpush2.msra.mxu0 0.0
    %136 = vmatprep.subr.mxu0 0.0
    %137 = vmatpush2.msra.mxu0 0.0
    %138 = vmatprep.subr.mxu0 0.0
    %139 = vmatpush2.msra.mxu0 0.0
    %140 = vmatprep.subr.mxu0 0.0
    %141 = vmatpush2.msra.mxu0 0.0
    %142 = vmatprep.subr.mxu0 0.0
    %143 = vmatpush2.msra.mxu0 0.0
    %144 = vmatprep.subr.mxu0 0.0
    %145 = vmatpush2.msra.mxu0 0.0
    %146 = vmatprep.subr.mxu0 0.0
    %147 = vmatpush2.msra.mxu0 0.0
    %148 = vmatprep.subr.mxu0 0.0
    %149 = vmatpush2.msra.mxu0 0.0
    %150 = vmatprep.subr.mxu0 0.0
    %151 = vmatpush2.msra.mxu0 0.0
    %152 = vmatprep.subr.mxu0 0.0
    %153 = vmatpush2.msra.mxu0 0.0
    %154 = vmatprep.subr.mxu0 0.0
    %155 = vmatpush2.msra.mxu0 0.0
    %156 = vmatprep.subr.mxu0 0.0
    %157 = vmatpush2.msra.mxu0 0.0
    %158 = vmatprep.subr.mxu0 0.0
    %159 = vmatpush2.msra.mxu0 0.0
    %160 = vmatprep.subr.mxu0 0.0
    %161 = vmatpush2.msra.mxu0 0.0
    %162 = vmatprep.subr.mxu0 0.0
    %163 = vmatpush2.msra.mxu0 0.0
    %164 = vmatprep.mubr.f32.mxu0 0.0
    %165 = vmatmul.mubr.f32.gmra.mxu0 %v91
    %v166 = vpop.f32.mrf.mxu0
    %v167 = vadd.f32 %v87, %v166
    %v168 = vpop.f32.mrf.mxu0
    %169 = vmatprep.mubr.f32.mxu0 0.0
    %170 = vmatmul.mubr.f32.gmra.mxu0 %v94
    %v171 = vpop.f32.mrf.mxu0
    %v172 = vadd.f32 %v87, %v171
    %v173 = vpop.f32.mrf.mxu0
    %174 = vdwg.mxu0
    %v175 = vtanh.pop %v167
    %v176 = vtanh.pop %v172
    %v177 = vld [vmem:[%s3] sm:$0xff]
    %v178 = vld [vmem:[%s3 + $0x8] sm:$0xff]
    %v179 = vld [vmem:[%s3 + $0x10] sm:$0xff]
    %v180 = vld [vmem:[%s3 + $0x18] sm:$0xff]
    %v181 = vld [vmem:[#allocation6] sm:$0x1]
    %v183 = vlaneseq
    %v184 = vshrl.u32 %v183, 7
    %v185 = vsub.s32 0, %v184
    %v186 = vrot.slane %v181, %v185
    %vm188 = vcmask 261120
    %v190 = vsel %vm188, %v175, 0
    %v193 = vsel %vm188, %v176, 0
    %195 = vmatprep.subr.mxu0 0.0
    %196 = vmatpush1.msra.mxu0 0.0
    %197 = vmatprep.subr.mxu0 0.0
    %198 = vmatpush1.msra.mxu0 0.0
    %199 = vmatprep.subr.mxu0 0.0
    %200 = vmatpush1.msra.mxu0 0.0
    %201 = vmatprep.subr.mxu0 0.0
    %202 = vmatpush1.msra.mxu0 0.0
    %203 = vmatprep.subr.mxu0 0.0
    %204 = vmatpush1.msra.mxu0 0.0
    %205 = vmatprep.subr.mxu0 0.0
    %206 = vmatpush1.msra.mxu0 0.0
    %207 = vmatprep.subr.mxu0 0.0
    %208 = vmatpush1.msra.mxu0 0.0
    %209 = vmatprep.subr.mxu0 0.0
    %210 = vmatpush1.msra.mxu0 0.0
    %211 = vmatprep.subr.mxu0 0.0
    %212 = vmatpush1.msra.mxu0 0.0
    %213 = vmatprep.subr.mxu0 0.0
    %214 = vmatpush1.msra.mxu0 0.0
    %215 = vmatprep.subr.mxu0 0.0
    %216 = vmatpush1.msra.mxu0 0.0
    %217 = vmatprep.subr.mxu0 0.0
    %218 = vmatpush1.msra.mxu0 0.0
    %219 = vmatprep.subr.mxu0 0.0
    %220 = vmatpush1.msra.mxu0 %v180
    %221 = vmatprep.subr.mxu0 0.0
    %222 = vmatpush1.msra.mxu0 %v179
    %223 = vmatprep.subr.mxu0 0.0
    %224 = vmatpush1.msra.mxu0 %v178
    %225 = vmatprep.subr.mxu0 0.0
    %226 = vmatpush1.msra.mxu0 %v177
    %227 = vmatprep.subr.mxu0 0.0
    %228 = vmatpush2.msra.mxu0 0.0
    %229 = vmatprep.subr.mxu0 0.0
    %230 = vmatpush2.msra.mxu0 0.0
    %231 = vmatprep.subr.mxu0 0.0
    %232 = vmatpush2.msra.mxu0 0.0
    %233 = vmatprep.subr.mxu0 0.0
    %234 = vmatpush2.msra.mxu0 0.0
    %235 = vmatprep.subr.mxu0 0.0
    %236 = vmatpush2.msra.mxu0 0.0
    %237 = vmatprep.subr.mxu0 0.0
    %238 = vmatpush2.msra.mxu0 0.0
    %239 = vmatprep.subr.mxu0 0.0
    %240 = vmatpush2.msra.mxu0 0.0
    %241 = vmatprep.subr.mxu0 0.0
    %242 = vmatpush2.msra.mxu0 0.0
    %243 = vmatprep.subr.mxu0 0.0
    %244 = vmatpush2.msra.mxu0 0.0
    %245 = vmatprep.subr.mxu0 0.0
    %246 = vmatpush2.msra.mxu0 0.0
    %247 = vmatprep.subr.mxu0 0.0
    %248 = vmatpush2.msra.mxu0 0.0
    %249 = vmatprep.subr.mxu0 0.0
    %250 = vmatpush2.msra.mxu0 0.0
    %251 = vmatprep.subr.mxu0 0.0
    %252 = vmatpush2.msra.mxu0 0.0
    %253 = vmatprep.subr.mxu0 0.0
    %254 = vmatpush2.msra.mxu0 0.0
    %255 = vmatprep.subr.mxu0 0.0
    %256 = vmatpush2.msra.mxu0 0.0
    %257 = vmatprep.subr.mxu0 0.0
    %258 = vmatpush2.msra.mxu0 0.0
    %259 = vmatprep.mubr.f32.mxu0 0.0
    %260 = vmatmul.mubr.f32.gmra.mxu0 %v190
    %v261 = vpop.f32.mrf.mxu0
    %v262 = vadd.f32 %v186, %v261
    %v263 = vpop.f32.mrf.mxu0
    %264 = vmatprep.mubr.f32.mxu0 0.0
    %265 = vmatmul.mubr.f32.gmra.mxu0 %v193
    %v266 = vpop.f32.mrf.mxu0
    %v267 = vadd.f32 %v186, %v266
    %v268 = vpop.f32.mrf.mxu0
    %269 = vdwg.mxu0
    %v270 = vtanh.pop %v262
    %v271 = vtanh.pop %v267
    %v272 = vld [vmem:[%s5] sm:$0xff]
    %v273 = vld [vmem:[%s5 + $0x8] sm:$0xff]
    %v274 = vld [vmem:[%s5 + $0x10] sm:$0xff]
    %v275 = vld [vmem:[%s5 + $0x18] sm:$0xff]
    %v276 = vld [vmem:[#allocation7] sm:$0x1]
    %v278 = vlaneseq
    %v279 = vshrl.u32 %v278, 7
    %v280 = vsub.s32 0, %v279
    %v281 = vrot.slane %v276, %v280
    %v284 = vsel %vm188, %v270, 0
    %v287 = vsel %vm188, %v271, 0
    %289 = vmatprep.subr.mxu0 0.0
    %290 = vmatpush1.msra.mxu0 0.0
    %291 = vmatprep.subr.mxu0 0.0
    %292 = vmatpush1.msra.mxu0 0.0
    %293 = vmatprep.subr.mxu0 0.0
    %294 = vmatpush1.msra.mxu0 0.0
    %295 = vmatprep.subr.mxu0 0.0
    %296 = vmatpush1.msra.mxu0 0.0
    %297 = vmatprep.subr.mxu0 0.0
    %298 = vmatpush1.msra.mxu0 0.0
    %299 = vmatprep.subr.mxu0 0.0
    %300 = vmatpush1.msra.mxu0 0.0
    %301 = vmatprep.subr.mxu0 0.0
    %302 = vmatpush1.msra.mxu0 0.0
    %303 = vmatprep.subr.mxu0 0.0
    %304 = vmatpush1.msra.mxu0 0.0
    %305 = vmatprep.subr.mxu0 0.0
    %306 = vmatpush1.msra.mxu0 0.0
    %307 = vmatprep.subr.mxu0 0.0
    %308 = vmatpush1.msra.mxu0 0.0
    %309 = vmatprep.subr.mxu0 0.0
    %310 = vmatpush1.msra.mxu0 0.0
    %311 = vmatprep.subr.mxu0 0.0
    %312 = vmatpush1.msra.mxu0 0.0
    %313 = vmatprep.subr.mxu0 0.0
    %314 = vmatpush1.msra.mxu0 %v275
    %315 = vmatprep.subr.mxu0 0.0
    %316 = vmatpush1.msra.mxu0 %v274
    %317 = vmatprep.subr.mxu0 0.0
    %318 = vmatpush1.msra.mxu0 %v273
    %319 = vmatprep.subr.mxu0 0.0
    %320 = vmatpush1.msra.mxu0 %v272
    %321 = vmatprep.subr.mxu0 0.0
    %322 = vmatpush2.msra.mxu0 0.0
    %323 = vmatprep.subr.mxu0 0.0
    %324 = vmatpush2.msra.mxu0 0.0
    %325 = vmatprep.subr.mxu0 0.0
    %326 = vmatpush2.msra.mxu0 0.0
    %327 = vmatprep.subr.mxu0 0.0
    %328 = vmatpush2.msra.mxu0 0.0
    %329 = vmatprep.subr.mxu0 0.0
    %330 = vmatpush2.msra.mxu0 0.0
    %331 = vmatprep.subr.mxu0 0.0
    %332 = vmatpush2.msra.mxu0 0.0
    %333 = vmatprep.subr.mxu0 0.0
    %334 = vmatpush2.msra.mxu0 0.0
    %335 = vmatprep.subr.mxu0 0.0
    %336 = vmatpush2.msra.mxu0 0.0
    %337 = vmatprep.subr.mxu0 0.0
    %338 = vmatpush2.msra.mxu0 0.0
    %339 = vmatprep.subr.mxu0 0.0
    %340 = vmatpush2.msra.mxu0 0.0
    %341 = vmatprep.subr.mxu0 0.0
    %342 = vmatpush2.msra.mxu0 0.0
    %343 = vmatprep.subr.mxu0 0.0
    %344 = vmatpush2.msra.mxu0 0.0
    %345 = vmatprep.subr.mxu0 0.0
    %346 = vmatpush2.msra.mxu0 0.0
    %347 = vmatprep.subr.mxu0 0.0
    %348 = vmatpush2.msra.mxu0 0.0
    %349 = vmatprep.subr.mxu0 0.0
    %350 = vmatpush2.msra.mxu0 0.0
    %351 = vmatprep.subr.mxu0 0.0
    %352 = vmatpush2.msra.mxu0 0.0
    %353 = vmatprep.mubr.f32.mxu0 0.0
    %354 = vmatmul.mubr.f32.gmra.mxu0 %v284
    %v355 = vpop.f32.mrf.mxu0
    %v356 = vadd.f32 %v281, %v355
    %v357 = vpop.f32.mrf.mxu0
    %358 = vmatprep.mubr.f32.mxu0 0.0
    %359 = vmatmul.mubr.f32.gmra.mxu0 %v287
    %v360 = vpop.f32.mrf.mxu0
    %v361 = vadd.f32 %v281, %v360
    %v362 = vpop.f32.mrf.mxu0
    %363 = vdwg.mxu0
    %v364 = vtanh.pop %v356
    %v365 = vtanh.pop %v361
    %v366 = vld [vmem:[%s7] sm:$0xff]
    %v367 = vld [vmem:[%s7 + $0x8] sm:$0xff]
    %v368 = vld [vmem:[%s7 + $0x10] sm:$0xff]
    %v369 = vld [vmem:[%s7 + $0x18] sm:$0xff]
    %v370 = vld [vmem:[%s8] sm:$0x1]
    %v372 = vlaneseq
    %v373 = vshrl.u32 %v372, 7
    %v374 = vsub.s32 0, %v373
    %v375 = vrot.slane %v370, %v374
    %v378 = vsel %vm188, %v364, 0
    %v381 = vsel %vm188, %v365, 0
    %383 = vmatprep.subr.mxu0 0.0
    %384 = vmatpush1.msra.mxu0 0.0
    %385 = vmatprep.subr.mxu0 0.0
    %386 = vmatpush1.msra.mxu0 0.0
    %387 = vmatprep.subr.mxu0 0.0
    %388 = vmatpush1.msra.mxu0 0.0
    %389 = vmatprep.subr.mxu0 0.0
    %390 = vmatpush1.msra.mxu0 0.0
    %391 = vmatprep.subr.mxu0 0.0
    %392 = vmatpush1.msra.mxu0 0.0
    %393 = vmatprep.subr.mxu0 0.0
    %394 = vmatpush1.msra.mxu0 0.0
    %395 = vmatprep.subr.mxu0 0.0
    %396 = vmatpush1.msra.mxu0 0.0
    %397 = vmatprep.subr.mxu0 0.0
    %398 = vmatpush1.msra.mxu0 0.0
    %399 = vmatprep.subr.mxu0 0.0
    %400 = vmatpush1.msra.mxu0 0.0
    %401 = vmatprep.subr.mxu0 0.0
    %402 = vmatpush1.msra.mxu0 0.0
    %403 = vmatprep.subr.mxu0 0.0
    %404 = vmatpush1.msra.mxu0 0.0
    %405 = vmatprep.subr.mxu0 0.0
    %406 = vmatpush1.msra.mxu0 0.0
    %407 = vmatprep.subr.mxu0 0.0
    %408 = vmatpush1.msra.mxu0 %v369
    %409 = vmatprep.subr.mxu0 0.0
    %410 = vmatpush1.msra.mxu0 %v368
    %411 = vmatprep.subr.mxu0 0.0
    %412 = vmatpush1.msra.mxu0 %v367
    %413 = vmatprep.subr.mxu0 0.0
    %414 = vmatpush1.msra.mxu0 %v366
    %415 = vmatprep.subr.mxu0 0.0
    %416 = vmatpush2.msra.mxu0 0.0
    %417 = vmatprep.subr.mxu0 0.0
    %418 = vmatpush2.msra.mxu0 0.0
    %419 = vmatprep.subr.mxu0 0.0
    %420 = vmatpush2.msra.mxu0 0.0
    %421 = vmatprep.subr.mxu0 0.0
    %422 = vmatpush2.msra.mxu0 0.0
    %423 = vmatprep.subr.mxu0 0.0
    %424 = vmatpush2.msra.mxu0 0.0
    %425 = vmatprep.subr.mxu0 0.0
    %426 = vmatpush2.msra.mxu0 0.0
    %427 = vmatprep.subr.mxu0 0.0
    %428 = vmatpush2.msra.mxu0 0.0
    %429 = vmatprep.subr.mxu0 0.0
    %430 = vmatpush2.msra.mxu0 0.0
    %431 = vmatprep.subr.mxu0 0.0
    %432 = vmatpush2.msra.mxu0 0.0
    %433 = vmatprep.subr.mxu0 0.0
    %434 = vmatpush2.msra.mxu0 0.0
    %435 = vmatprep.subr.mxu0 0.0
    %436 = vmatpush2.msra.mxu0 0.0
    %437 = vmatprep.subr.mxu0 0.0
    %438 = vmatpush2.msra.mxu0 0.0
    %439 = vmatprep.subr.mxu0 0.0
    %440 = vmatpush2.msra.mxu0 0.0
    %441 = vmatprep.subr.mxu0 0.0
    %442 = vmatpush2.msra.mxu0 0.0
    %443 = vmatprep.subr.mxu0 0.0
    %444 = vmatpush2.msra.mxu0 0.0
    %445 = vmatprep.subr.mxu0 0.0
    %446 = vmatpush2.msra.mxu0 0.0
    %447 = vmatprep.mubr.f32.mxu0 0.0
    %448 = vmatmul.mubr.f32.gmra.mxu0 %v378
    %v449 = vpop.f32.mrf.mxu0
    %v450 = vadd.f32 %v375, %v449
    %v451 = vpop.f32.mrf.mxu0
    %452 = vmatprep.mubr.f32.mxu0 0.0
    %453 = vmatmul.mubr.f32.gmra.mxu0 %v381
    %v454 = vpop.f32.mrf.mxu0
    %v455 = vadd.f32 %v375, %v454
    %v456 = vpop.f32.mrf.mxu0
    %457 = vdwg.mxu0
    %vm458 = vcmask 23552
    %459 = vst.msk [vmem:[%s9] sm:$0xff] %vm458, %v450
    %460 = vst.msk [vmem:[%s9 + $0x8] sm:$0xff] %vm458, %v455
    // Predicated region
    $region54: #{tpu_custom_call.1} parent=1 // pred_check
      _
    $region55: #{tpu_custom_call.1} parent=1 // pred_check_branch
      %462 = sbr.rel (0) target = $region57
    $region56: #{tpu_custom_call.1} parent=1 // pred_region
      _
    $region57: #{tpu_custom_call.1} parent=1 // pred_fallthru
      _
    // Predicated region
    $region58: #{tpu_custom_call.1} parent=1 // pred_check
      _
    $region59: #{tpu_custom_call.1} parent=1 // pred_check_branch
      %464 = sbr.rel (0) target = $region61
    $region60: #{tpu_custom_call.1} parent=1 // pred_region
      _
    $region61: #{tpu_custom_call.1} parent=1 // pred_fallthru
      _
    %465 = vsyncpa [#allocation3], 1
    %466 = vsyncpa [#allocation5], 1
    %467 = vsyncpa [#allocation8], 1

</llo_original>
